<compile_context>
chip_gen: v5e
topology: v5e:2x2
jax: 0.10.0
libtpu: 0.0.40
codegen_flags: <defaults>
</compile_context>

<pallas_src>
import jax
import jax.numpy as jnp
from jax.experimental import pallas as pl
from jax.experimental.pallas import tpu as pltpu

RRELU_SLOPE = (1.0 / 8.0 + 1.0 / 3.0) / 2.0  # F.rrelu eval-mode negative slope


def _round_up(x, m):
    return (x + m - 1) // m * m


def _rgcn_kernel(dst_ref, etype_ref, hsrc_ref, wtab_ref, norm_ref, out_ref):
    rank = out_ref.shape[0]
    TN = out_ref.shape[1]
    TE = hsrc_ref.shape[1]
    nr_pad = wtab_ref.shape[1]
    R2 = rank // 2

    k = pl.program_id(1)

    # Output block index is constant across the E axis -> out_ref is resident
    # in VMEM for the whole reduction and can serve as the fp32 accumulator.
    @pl.when(k == 0)
    def _():
        out_ref[...] = jnp.zeros_like(out_ref)

    # ---- per-edge weight selection: one-hot(etype) x small resident table ----
    rel_iota = jax.lax.broadcasted_iota(jnp.int32, (nr_pad, TE), 0)
    onehot_rel = (rel_iota == etype_ref[...]).astype(jnp.float32)     # (NRp, TE)
    # rows of wtab: [w00 ; w10 ; w01 ; w11], each block of R2 rows
    w_sel = jnp.dot(wtab_ref[...], onehot_rel,
                    preferred_element_type=jnp.float32)               # (2*rank, TE)

    # ---- block-diagonal 2x2 bmm in de-interleaved, feature-major layout ----
    he = hsrc_ref[:R2, :]            # h[:, 0::2] -> (R2, TE)
    ho = hsrc_ref[R2:, :]            # h[:, 1::2] -> (R2, TE)
    w00 = w_sel[0:R2, :]
    w10 = w_sel[R2:2 * R2, :]
    w01 = w_sel[2 * R2:3 * R2, :]
    w11 = w_sel[3 * R2:, :]
    m_even = he * w00 + ho * w10                                      # (R2, TE)
    m_odd = he * w01 + ho * w11                                       # (R2, TE)
    msg_t = jnp.concatenate([m_even, m_odd], axis=0)                  # (rank, TE)

    # ---- scatter-sum: build the one-hot destination tile in-kernel ----
    n_off = pl.program_id(0) * TN
    node_iota = jax.lax.broadcasted_iota(jnp.int32, (TE, TN), 1) + n_off
    scat = (dst_ref[...] == node_iota).astype(jnp.float32)            # (TE, TN)
    out_ref[...] += jnp.dot(msg_t, scat, preferred_element_type=jnp.float32)

    # ---- finalize: norm multiply + rrelu (eval mode), lane-dense store ----
    @pl.when(k == pl.num_programs(1) - 1)
    def _():
        out = out_ref[...] * norm_ref[...]         # (rank, TN) * (1, TN)
        out_ref[...] = jnp.where(out >= 0, out, out * RRELU_SLOPE)


def rgcn_block_layer_forward(h, norm, src, dst, etype, weight, rank,
                             *, tile_n=128, tile_e=512):
    """Pallas-backed forward of RGCNBlockLayer.

    h:      (N, rank)   node features
    norm:   (N, 1)      node norms
    src:    (E,) int32  edge source node ids
    dst:    (E,) int32  edge destination node ids
    etype:  (E,) int32  edge relation types
    weight: (num_rels*2, rank//2 * 4) block-diagonal weights
    """
    N = h.shape[0]
    E = src.shape[0]
    R2 = rank // 2
    num_rel = weight.shape[0]

    TN = tile_n
    TE = min(tile_e, _round_up(E, 128))
    N_pad = _round_up(N, TN)
    E_pad = _round_up(E, TE)
    NR_pad = _round_up(num_rel, 8)
    pe = E_pad - E

    # --- edge arrays (padded edges scatter to node -1, i.e. nowhere) ---
    src_p = jnp.pad(src.astype(jnp.int32), (0, pe))
    dst_p = jnp.pad(dst.astype(jnp.int32), (0, pe), constant_values=-1)
    etype_p = jnp.pad(etype.astype(jnp.int32), (0, pe))
    dst_col = dst_p.reshape(E_pad, 1)
    etype_row = etype_p.reshape(1, E_pad)

    # --- source-feature gather, de-interleaved feature-major: (rank, E_pad) ---
    perm = jnp.concatenate([jnp.arange(0, rank, 2), jnp.arange(1, rank, 2)])
    h_src_t = h[src_p][:, perm].T.astype(jnp.float32)

    # --- tiny weight table, rearranged [w00 ; w10 ; w01 ; w11], transposed ---
    w00 = weight[:, 0::4]
    w01 = weight[:, 1::4]
    w10 = weight[:, 2::4]
    w11 = weight[:, 3::4]
    w_tab_t = jnp.concatenate([w00, w10, w01, w11], axis=1).T.astype(jnp.float32)
    w_tab_t = jnp.pad(w_tab_t, ((0, 0), (0, NR_pad - num_rel)))   # (2*rank, NR_pad)

    norm_row = jnp.pad(norm.reshape(-1).astype(jnp.float32), (0, N_pad - N),
                       constant_values=1.0).reshape(1, N_pad)

    grid = (N_pad // TN, E_pad // TE)

    cost = pl.CostEstimate(
        flops=int(2 * N_pad * E_pad * rank + 2 * E_pad * 2 * rank * NR_pad),
        transcendentals=0,
        bytes_accessed=int(4 * (E_pad * (rank + 2) + N_pad * (rank + 1)
                                + 2 * rank * NR_pad)),
    )

    out_t = pl.pallas_call(
        _rgcn_kernel,
        grid_spec=pltpu.PrefetchScalarGridSpec(
            num_scalar_prefetch=0,
            grid=grid,
            in_specs=[
                pl.BlockSpec((TE, 1), lambda i, k: (k, 0)),             # dst
                pl.BlockSpec((1, TE), lambda i, k: (0, k)),             # etype
                pl.BlockSpec((rank, TE), lambda i, k: (0, k)),          # h[src]^T
                pl.BlockSpec((2 * rank, NR_pad), lambda i, k: (0, 0)),  # W table
                pl.BlockSpec((1, TN), lambda i, k: (0, i)),             # norm
            ],
            out_specs=pl.BlockSpec((rank, TN), lambda i, k: (0, i)),
        ),
        out_shape=jax.ShapeDtypeStruct((rank, N_pad), jnp.float32),
        compiler_params=pltpu.CompilerParams(
            dimension_semantics=("parallel", "arbitrary")),
        cost_estimate=cost,
    )(dst_col, etype_row, h_src_t, w_tab_t, norm_row)

    # (rank, N_pad) -> (N, rank); re-interleave even/odd feature halves
    out_perm = out_t[:, :N].T                                   # (N, rank), permuted
    out = jnp.stack([out_perm[:, :R2], out_perm[:, R2:]], axis=-1).reshape(N, rank)
    return out


def rgcn_block_layer_reference(h, norm, src, dst, etype, weight, rank):
    """Pure-JAX reference mirroring the PyTorch module exactly."""
    E = src.shape[0]
    N = h.shape[0]
    submat = 2
    w_e = weight[etype].reshape(-1, submat, submat)        # (E*R2, 2, 2)
    node = h[src].reshape(-1, 1, submat)                   # (E*R2, 1, 2)
    msg = jnp.einsum('bij,bjk->bik', node, w_e).reshape(E, rank)
    agg = jax.ops.segment_sum(msg, dst, num_segments=N)    # fn.sum(msg -> h)
    out = agg * norm                                       # apply_func
    return jnp.where(out >= 0, out, out * RRELU_SLOPE)     # F.rrelu (eval)


if __name__ == "__main__":
    # Module hyperparameters (small, consistent with __init__)
    rank = 32
    num_rels = 3
    num_rel_types = num_rels * 2          # self.num_rels = num_rels * 2
    submat = 2
    diag = rank // 2 * submat ** 2        # = 2 * rank

    # Synthetic graph
    N = 16      # nodes
    E = 48      # edges

    key = jax.random.PRNGKey(0)
    k_h, k_norm, k_src, k_dst, k_type, k_w = jax.random.split(key, 6)

    h = jax.random.normal(k_h, (N, rank), dtype=jnp.float32)
    norm = jax.random.uniform(k_norm, (N, 1), dtype=jnp.float32,
                              minval=0.1, maxval=1.0)
    src = jax.random.randint(k_src, (E,), 0, N, dtype=jnp.int32)
    dst = jax.random.randint(k_dst, (E,), 0, N, dtype=jnp.int32)
    etype = jax.random.randint(k_type, (E,), 0, num_rel_types, dtype=jnp.int32)

    # xavier_uniform_ with gain=calculate_gain('relu')=sqrt(2)
    gain = jnp.sqrt(2.0)
    bound = gain * jnp.sqrt(6.0 / (num_rel_types + diag))
    weight = jax.random.uniform(k_w, (num_rel_types, diag), dtype=jnp.float32,
                                minval=-bound, maxval=bound)

    out = rgcn_block_layer_forward(h, norm, src, dst, etype, weight, rank)
    out = jax.block_until_ready(out)

    ref = rgcn_block_layer_reference(h, norm, src, dst, etype, weight, rank)
    assert out.shape == (N, rank)
    assert jnp.allclose(out, ref, atol=1e-5, rtol=1e-5), (
        f"mismatch: max abs err {jnp.max(jnp.abs(out - ref))}")

    print("KERNEL_OK")
</pallas_src>

<mosaic_0001>
module attributes {stable_mosaic.version = 11 : i64} {
  func.func @_rgcn_kernel(%arg0: i32, %arg1: i32, %arg2: memref<128x1xi32, #tpu.memory_space<vmem>>, %arg3: memref<1x128xi32, #tpu.memory_space<vmem>>, %arg4: memref<32x128xf32, #tpu.memory_space<vmem>>, %arg5: memref<64x8xf32, #tpu.memory_space<vmem>>, %arg6: memref<1x128xf32, #tpu.memory_space<vmem>>, %arg7: memref<32x128xf32, #tpu.memory_space<vmem>>) attributes {dimension_semantics = [#tpu.dimension_semantics<parallel>, #tpu.dimension_semantics<arbitrary>], iteration_bounds = array<i64: 1, 1>, scalar_prefetch = 0 : i64, scratch_operands = 0 : i64, tpu.core_type = #tpu.core_type<tc>, window_params = [{transform_indices = @transform_0, window_bounds = array<i64: 128, 1>}, {transform_indices = @transform_1, window_bounds = array<i64: 1, 128>}, {transform_indices = @transform_2, window_bounds = array<i64: 32, 128>}, {pipeline_mode = #tpu.pipeline_mode<synchronous>, transform_indices = @transform_3, window_bounds = array<i64: 64, 8>}, {transform_indices = @transform_4, window_bounds = array<i64: 1, 128>}, {transform_indices = @transform_5, window_bounds = array<i64: 32, 128>}]} {
    %c0_i32 = arith.constant 0 : i32
    %0 = arith.cmpi eq, %arg1, %c0_i32 : i32
    %1 = arith.extui %0 : i1 to i32
    %c0_i32_0 = arith.constant 0 : i32
    %2 = arith.cmpi ne, %1, %c0_i32_0 : i32
    scf.if %2 {
      %cst_16 = arith.constant 0.000000e+00 : f32
      %40 = vector.broadcast %cst_16 : f32 to vector<32x128xf32>
      %c0_17 = arith.constant 0 : index
      %c0_18 = arith.constant 0 : index
      %41 = vector.load %arg7[%c0_17, %c0_18] : memref<32x128xf32, #tpu.memory_space<vmem>>, vector<32x128xf32>
      tpu.vector_store %arg7[%c0_17, %c0_18], %40 {strides = array<i32>} : memref<32x128xf32, #tpu.memory_space<vmem>>, vector<32x128xf32>,
    } else {
    }
    %3 = tpu.iota {dimensions = array<i32: 0>} : vector<8x128xi32>
    %c0 = arith.constant 0 : index
    %c0_1 = arith.constant 0 : index
    %4 = vector.load %arg3[%c0, %c0_1] : memref<1x128xi32, #tpu.memory_space<vmem>>, vector<1x128xi32>
    %5 = vector.broadcast %4 : vector<1x128xi32> to vector<8x128xi32>
    %6 = arith.cmpi eq, %3, %5 : vector<8x128xi32>
    %7 = arith.extui %6 : vector<8x128xi1> to vector<8x128xi32>
    %8 = arith.sitofp %7 : vector<8x128xi32> to vector<8x128xf32>
    %c0_2 = arith.constant 0 : index
    %c0_3 = arith.constant 0 : index
    %9 = vector.load %arg5[%c0_2, %c0_3] : memref<64x8xf32, #tpu.memory_space<vmem>>, vector<64x8xf32>
    %cst = arith.constant dense<0.000000e+00> : vector<64x128xf32>
    %10 = tpu.matmul %9, %8, %cst {dimension_numbers = #tpu.dot_dimension_numbers<[1], [0], [0], [1], [0, 0, 1, 1], [], []>} : vector<64x8xf32>, vector<8x128xf32>, vector<64x128xf32> -> vector<64x128xf32>
    %c0_4 = arith.constant 0 : index
    %c0_5 = arith.constant 0 : index
    %11 = vector.load %arg4[%c0_4, %c0_5] : memref<32x128xf32, #tpu.memory_space<vmem>>, vector<16x128xf32>
    %c16 = arith.constant 16 : index
    %c0_6 = arith.constant 0 : index
    %12 = vector.load %arg4[%c16, %c0_6] : memref<32x128xf32, #tpu.memory_space<vmem>>, vector<16x128xf32>
    %13 = vector.extract_strided_slice %10 {offsets = [0, 0], sizes = [16, 128], strides = [1, 1]} : vector<64x128xf32> to vector<16x128xf32>
    %14 = vector.extract_strided_slice %10 {offsets = [16, 0], sizes = [16, 128], strides = [1, 1]} : vector<64x128xf32> to vector<16x128xf32>
    %15 = vector.extract_strided_slice %10 {offsets = [32, 0], sizes = [16, 128], strides = [1, 1]} : vector<64x128xf32> to vector<16x128xf32>
    %16 = vector.extract_strided_slice %10 {offsets = [48, 0], sizes = [16, 128], strides = [1, 1]} : vector<64x128xf32> to vector<16x128xf32>
    %17 = arith.mulf %11, %13 : vector<16x128xf32>
    %18 = arith.mulf %12, %14 : vector<16x128xf32>
    %19 = arith.addf %17, %18 : vector<16x128xf32>
    %20 = arith.mulf %11, %15 : vector<16x128xf32>
    %21 = arith.mulf %12, %16 : vector<16x128xf32>
    %22 = arith.addf %20, %21 : vector<16x128xf32>
    %23 = tpu.concatenate %19, %22 in 0 : vector<16x128xf32>, vector<16x128xf32> -> vector<32x128xf32>
    %c128_i32 = arith.constant 128 : i32
    %24 = arith.muli %arg0, %c128_i32 : i32
    %25 = tpu.iota {dimensions = array<i32: 1>} : vector<128x128xi32>
    %26 = vector.broadcast %24 : i32 to vector<128x128xi32>
    %27 = arith.addi %25, %26 : vector<128x128xi32>
    %c0_7 = arith.constant 0 : index
    %c0_8 = arith.constant 0 : index
    %28 = vector.load %arg2[%c0_7, %c0_8] : memref<128x1xi32, #tpu.memory_space<vmem>>, vector<128x1xi32>
    %29 = vector.broadcast %28 : vector<128x1xi32> to vector<128x128xi32>
    %30 = arith.cmpi eq, %29, %27 : vector<128x128xi32>
    %31 = arith.extui %30 : vector<128x128xi1> to vector<128x128xi32>
    %32 = arith.sitofp %31 : vector<128x128xi32> to vector<128x128xf32>
    %c0_9 = arith.constant 0 : index
    %c0_10 = arith.constant 0 : index
    %33 = vector.load %arg7[%c0_9, %c0_10] : memref<32x128xf32, #tpu.memory_space<vmem>>, vector<32x128xf32>
    %cst_11 = arith.constant dense<0.000000e+00> : vector<32x128xf32>
    %34 = tpu.matmul %23, %32, %cst_11 {dimension_numbers = #tpu.dot_dimension_numbers<[1], [0], [0], [1], [0, 0, 1, 1], [], []>} : vector<32x128xf32>, vector<128x128xf32>, vector<32x128xf32> -> vector<32x128xf32>
    %35 = arith.addf %33, %34 : vector<32x128xf32>
    %c0_12 = arith.constant 0 : index
    %c0_13 = arith.constant 0 : index
    %36 = vector.load %arg7[%c0_12, %c0_13] : memref<32x128xf32, #tpu.memory_space<vmem>>, vector<32x128xf32>
    tpu.vector_store %arg7[%c0_12, %c0_13], %35 {strides = array<i32>} : memref<32x128xf32, #tpu.memory_space<vmem>>, vector<32x128xf32>,
    %c0_i32_14 = arith.constant 0 : i32
    %37 = arith.cmpi eq, %arg1, %c0_i32_14 : i32
    %38 = arith.extui %37 : i1 to i32
    %c0_i32_15 = arith.constant 0 : i32
    %39 = arith.cmpi ne, %38, %c0_i32_15 : i32
    scf.if %39 {
      %c0_16 = arith.constant 0 : index
      %c0_17 = arith.constant 0 : index
      %40 = vector.load %arg7[%c0_16, %c0_17] : memref<32x128xf32, #tpu.memory_space<vmem>>, vector<32x128xf32>
      %c0_18 = arith.constant 0 : index
      %c0_19 = arith.constant 0 : index
      %41 = vector.load %arg6[%c0_18, %c0_19] : memref<1x128xf32, #tpu.memory_space<vmem>>, vector<1x128xf32>
      %42 = vector.broadcast %41 : vector<1x128xf32> to vector<32x128xf32>
      %43 = arith.mulf %40, %42 : vector<32x128xf32>
      %cst_20 = arith.constant 0.000000e+00 : f32
      %44 = vector.broadcast %cst_20 : f32 to vector<32x128xf32>
      %45 = arith.cmpf oge, %43, %44 : vector<32x128xf32>
      %cst_21 = arith.constant 0.229166672 : f32
      %46 = vector.broadcast %cst_21 : f32 to vector<32x128xf32>
      %47 = arith.mulf %43, %46 : vector<32x128xf32>
      %48 = arith.select %45, %43, %47 : vector<32x128xi1>, vector<32x128xf32>
      %c0_22 = arith.constant 0 : index
      %c0_23 = arith.constant 0 : index
      %49 = vector.load %arg7[%c0_22, %c0_23] : memref<32x128xf32, #tpu.memory_space<vmem>>, vector<32x128xf32>
      tpu.vector_store %arg7[%c0_22, %c0_23], %48 {strides = array<i32>} : memref<32x128xf32, #tpu.memory_space<vmem>>, vector<32x128xf32>,
    } else {
    }
    return
  }
  func.func @transform_0(%arg0: i32, %arg1: i32) -> (i32, i32) {
    %c0_i32 = arith.constant 0 : i32
    %c0_i32_0 = arith.constant 0 : i32
    return %arg1, %c0_i32 : i32, i32
  }
  func.func @transform_1(%arg0: i32, %arg1: i32) -> (i32, i32) {
    %c0_i32 = arith.constant 0 : i32
    %c0_i32_0 = arith.constant 0 : i32
    return %c0_i32, %arg1 : i32, i32
  }
  func.func @transform_2(%arg0: i32, %arg1: i32) -> (i32, i32) {
    %c0_i32 = arith.constant 0 : i32
    %c0_i32_0 = arith.constant 0 : i32
    return %c0_i32, %arg1 : i32, i32
  }
  func.func @transform_3(%arg0: i32, %arg1: i32) -> (i32, i32) {
    %c0_i32 = arith.constant 0 : i32
    %c0_i32_0 = arith.constant 0 : i32
    %c0_i32_1 = arith.constant 0 : i32
    return %c0_i32, %c0_i32_0 : i32, i32
  }
  func.func @transform_4(%arg0: i32, %arg1: i32) -> (i32, i32) {
    %c0_i32 = arith.constant 0 : i32
    %c0_i32_0 = arith.constant 0 : i32
    return %c0_i32, %arg0 : i32, i32
  }
  func.func @transform_5(%arg0: i32, %arg1: i32) -> (i32, i32) {
    %c0_i32 = arith.constant 0 : i32
    %c0_i32_0 = arith.constant 0 : i32
    return %c0_i32, %arg0 : i32, i32
  }
}

</mosaic_0001>

<llo_original>
// kernel: tpu_custom_call.1
$region0: #{tpu_custom_call.1}
  #allocation0 [shape = 'u32[]', space=smem, size = 0x4, offset = 0x4, fixed_abs, tag = 'smem constant byte address 0x4 - core index']
  #allocation1 [shape = 'u32[72,128]{1,0:T(1,128)}', space=vmem, size = 0x9000, scoped, tag = 'internal scratch']
  %s0 = inlined_call_operand.vmem [shape: s32[128,1], index: 0, kind: input, shape index: {}]
  %s1 = inlined_call_operand.vmem [shape: s32[1,128], index: 1, kind: input, shape index: {}]
  %s2 = inlined_call_operand.vmem [shape: f32[32,128], index: 2, kind: input, shape index: {}]
  %s3 = inlined_call_operand.vmem [shape: f32[64,8], index: 3, kind: input, shape index: {}]
  %s4 = inlined_call_operand.vmem [shape: f32[1,128], index: 4, kind: input, shape index: {}]
  %s5 = inlined_call_operand.hbm [shape: f32[32,128], index: 5, kind: output, shape index: {}]
  %s6 = sld [smem:[#allocation0]]
  $region38: #{tpu_custom_call.1} parent=0
    _
  %s8 = ssub.s32 1, %s6
  %s9 = scalar_select 0, %s8, %s6
  $region1: #{tpu_custom_call.1} parent=0
    #allocation2 [shape = 'u8[16384]{0}', space=vmem, size = 0x4000, scoped, tag = 'output window, operand 0, single buffered']
    #allocation3 [shape = 's32[1]{0}', space=sflag, size = 0x4, scoped, tag = 'scoped memory for tpu_custom_call.1']
    %10 = vsyncpa [#allocation3], 0
    // Predicated region
    $region2: #{tpu_custom_call.1} parent=1 // pred_check
      _
    $region3: #{tpu_custom_call.1} parent=1 // pred_check_branch
      %12 = sbr.rel (0) target = $region5
    $region4: #{tpu_custom_call.1} parent=1 // pred_region
      _
    $region5: #{tpu_custom_call.1} parent=1 // pred_fallthru
      _
    // Predicated region
    $region6: #{tpu_custom_call.1} parent=1 // pred_check
      _
    $region7: #{tpu_custom_call.1} parent=1 // pred_check_branch
      %14 = sbr.rel (0) target = $region9
    $region8: #{tpu_custom_call.1} parent=1 // pred_region
      _
    $region9: #{tpu_custom_call.1} parent=1 // pred_fallthru
      _
    // Predicated region
    $region10: #{tpu_custom_call.1} parent=1 // pred_check
      _
    $region11: #{tpu_custom_call.1} parent=1 // pred_check_branch
      %16 = sbr.rel (0) target = $region13
    $region12: #{tpu_custom_call.1} parent=1 // pred_region
      _
    $region13: #{tpu_custom_call.1} parent=1 // pred_fallthru
      _
    // Predicated region
    $region14: #{tpu_custom_call.1} parent=1 // pred_check
      _
    $region15: #{tpu_custom_call.1} parent=1 // pred_check_branch
      %18 = sbr.rel (0) target = $region17
    $region16: #{tpu_custom_call.1} parent=1 // pred_region
      _
    $region17: #{tpu_custom_call.1} parent=1 // pred_fallthru
      _
    // Predicated region
    $region18: #{tpu_custom_call.1} parent=1 // pred_check
      _
    $region19: #{tpu_custom_call.1} parent=1 // pred_check_branch
      %20 = sbr.rel (0) target = $region21
    $region20: #{tpu_custom_call.1} parent=1 // pred_region
      _
    $region21: #{tpu_custom_call.1} parent=1 // pred_fallthru
      _
    %p21 = scmp.eq.s32.totalorder 0, 0
    // Predicated region
    $region22: #{tpu_custom_call.1} parent=1 // pred_check
      %p22 = pneg %p21
    $region23: #{tpu_custom_call.1} parent=1 // pred_check_branch
      %24 = sbr.rel (%p22) target = $region25
    $region24: #{tpu_custom_call.1} parent=1 // pred_region
      %25 = vst [vmem:[#allocation2] sm:$0xff] 0.0
      %26 = vst [vmem:[#allocation2 + $0x8] sm:$0xff] 0.0
      %27 = vst [vmem:[#allocation2 + $0x10] sm:$0xff] 0.0
      %28 = vst [vmem:[#allocation2 + $0x18] sm:$0xff] 0.0
    $region25: #{tpu_custom_call.1} parent=1 // pred_fallthru
      _
    %v29 = vlaneseq
    %v30 = vshrl.u32 %v29, 7
    %v31 = vld [vmem:[%s1] sm:$0x1]
    %v32 = vperm.slane %v31, 0
    %vm33 = vcmp.eq.s32.totalorder %v30, %v32
    %v34 = vsel %vm33, 1, 0
    %v35 = vcvt.s32.f32 %v34
    %v36 = vld [vmem:[%s3] sm:$0xff]
    %v37 = vld [vmem:[%s3 + $0x8] sm:$0xff]
    %v38 = vld [vmem:[%s3 + $0x10] sm:$0xff]
    %v39 = vld [vmem:[%s3 + $0x18] sm:$0xff]
    %v40 = vld [vmem:[%s3 + $0x20] sm:$0xff]
    %v41 = vld [vmem:[%s3 + $0x28] sm:$0xff]
    %v42 = vld [vmem:[%s3 + $0x30] sm:$0xff]
    %v43 = vld [vmem:[%s3 + $0x38] sm:$0xff]
    %vm44 = vcmask 64512
    %v46 = vsel %vm44, %v36, 0
    %v49 = vsel %vm44, %v37, 0
    %v52 = vsel %vm44, %v38, 0
    %v55 = vsel %vm44, %v39, 0
    %v58 = vsel %vm44, %v40, 0
    %v61 = vsel %vm44, %v41, 0
    %v64 = vsel %vm44, %v42, 0
    %v67 = vsel %vm44, %v43, 0
    %69 = vmatpush.msra.mxu0 0.0
    %70 = vmatpush.msra.mxu0 0.0
    %71 = vmatpush.msra.mxu0 0.0
    %72 = vmatpush.msra.mxu0 0.0
    %73 = vmatpush.msra.mxu0 0.0
    %74 = vmatpush.msra.mxu0 0.0
    %75 = vmatpush.msra.mxu0 0.0
    %76 = vmatpush.msra.mxu0 0.0
    %77 = vmatpush.msra.mxu0 0.0
    %78 = vmatpush.msra.mxu0 0.0
    %79 = vmatpush.msra.mxu0 0.0
    %80 = vmatpush.msra.mxu0 0.0
    %81 = vmatpush.msra.mxu0 0.0
    %82 = vmatpush.msra.mxu0 0.0
    %83 = vmatpush.msra.mxu0 0.0
    %84 = vmatpush.msra.mxu0 %v35
    %85 = vmatmul.f32.gmra.mxu0 %v46
    %v86 = vpop.f32.mrf.mxu0
    %v87 = vadd.f32 0.0, %v86
    %88 = vmatmul.f32.gmra.mxu0 %v49
    %v89 = vpop.f32.mrf.mxu0
    %v90 = vadd.f32 0.0, %v89
    %91 = vmatmul.f32.gmra.mxu0 %v52
    %v92 = vpop.f32.mrf.mxu0
    %v93 = vadd.f32 0.0, %v92
    %94 = vmatmul.f32.gmra.mxu0 %v55
    %v95 = vpop.f32.mrf.mxu0
    %v96 = vadd.f32 0.0, %v95
    %97 = vmatmul.f32.gmra.mxu0 %v58
    %v98 = vpop.f32.mrf.mxu0
    %v99 = vadd.f32 0.0, %v98
    %100 = vmatmul.f32.gmra.mxu0 %v61
    %v101 = vpop.f32.mrf.mxu0
    %v102 = vadd.f32 0.0, %v101
    %103 = vmatmul.f32.gmra.mxu0 %v64
    %v104 = vpop.f32.mrf.mxu0
    %v105 = vadd.f32 0.0, %v104
    %106 = vmatmul.f32.gmra.mxu0 %v67
    %v107 = vpop.f32.mrf.mxu0
    %v108 = vadd.f32 0.0, %v107
    %109 = vdwg.mxu0
    %v110 = vld [vmem:[%s2] sm:$0xff]
    %v111 = vld [vmem:[%s2 + $0x8] sm:$0xff]
    %v112 = vld [vmem:[%s2 + $0x10] sm:$0xff]
    %v113 = vld [vmem:[%s2 + $0x18] sm:$0xff]
    %v114 = vmul.f32 %v110, %v87
    %v115 = vmul.f32 %v111, %v90
    %v116 = vmul.f32 %v112, %v93
    %v117 = vmul.f32 %v113, %v96
    %v118 = vadd.f32 %v114, %v116
    %v119 = vadd.f32 %v115, %v117
    %v120 = vmul.f32 %v110, %v99
    %v121 = vmul.f32 %v111, %v102
    %v122 = vmul.f32 %v112, %v105
    %v123 = vmul.f32 %v113, %v108
    %v124 = vadd.f32 %v120, %v122
    %v125 = vadd.f32 %v121, %v123
    %s126 = smul.u32 0, 128
    %v127 = vlaneseq
    %v128 = vand.u32 %v127, 127
    %v129 = vstv %s126
    %v130 = vadd.s32 %v128, %v129
    %v131 = vld [vmem:[%s0] sm:$0xff]
    %v132 = vld [vmem:[%s0 + $0x8] sm:$0xff]
    %v133 = vld [vmem:[%s0 + $0x10] sm:$0xff]
    %v134 = vld [vmem:[%s0 + $0x18] sm:$0xff]
    %v135 = vld [vmem:[%s0 + $0x20] sm:$0xff]
    %v136 = vld [vmem:[%s0 + $0x28] sm:$0xff]
    %v137 = vld [vmem:[%s0 + $0x30] sm:$0xff]
    %v138 = vld [vmem:[%s0 + $0x38] sm:$0xff]
    %v139 = vld [vmem:[%s0 + $0x40] sm:$0xff]
    %v140 = vld [vmem:[%s0 + $0x48] sm:$0xff]
    %v141 = vld [vmem:[%s0 + $0x50] sm:$0xff]
    %v142 = vld [vmem:[%s0 + $0x58] sm:$0xff]
    %v143 = vld [vmem:[%s0 + $0x60] sm:$0xff]
    %v144 = vld [vmem:[%s0 + $0x68] sm:$0xff]
    %v145 = vld [vmem:[%s0 + $0x70] sm:$0xff]
    %v146 = vld [vmem:[%s0 + $0x78] sm:$0xff]
    %147 = vset.pattern.permute.xlu0 0
    %148 = vperm.xlu0 %147, %v131
    %v149 = vpop.permute.xlu0 %148
    %150 = vset.pattern.permute.xlu0 0
    %151 = vperm.xlu0 %150, %v132
    %v152 = vpop.permute.xlu0 %151
    %153 = vset.pattern.permute.xlu0 0
    %154 = vperm.xlu0 %153, %v133
    %v155 = vpop.permute.xlu0 %154
    %156 = vset.pattern.permute.xlu0 0
    %157 = vperm.xlu0 %156, %v134
    %v158 = vpop.permute.xlu0 %157
    %159 = vset.pattern.permute.xlu0 0
    %160 = vperm.xlu0 %159, %v135
    %v161 = vpop.permute.xlu0 %160
    %162 = vset.pattern.permute.xlu0 0
    %163 = vperm.xlu0 %162, %v136
    %v164 = vpop.permute.xlu0 %163
    %165 = vset.pattern.permute.xlu0 0
    %166 = vperm.xlu0 %165, %v137
    %v167 = vpop.permute.xlu0 %166
    %168 = vset.pattern.permute.xlu0 0
    %169 = vperm.xlu0 %168, %v138
    %v170 = vpop.permute.xlu0 %169
    %171 = vset.pattern.permute.xlu0 0
    %172 = vperm.xlu0 %171, %v139
    %v173 = vpop.permute.xlu0 %172
    %174 = vset.pattern.permute.xlu0 0
    %175 = vperm.xlu0 %174, %v140
    %v176 = vpop.permute.xlu0 %175
    %177 = vset.pattern.permute.xlu0 0
    %178 = vperm.xlu0 %177, %v141
    %v179 = vpop.permute.xlu0 %178
    %180 = vset.pattern.permute.xlu0 0
    %181 = vperm.xlu0 %180, %v142
    %v182 = vpop.permute.xlu0 %181
    %183 = vset.pattern.permute.xlu0 0
    %184 = vperm.xlu0 %183, %v143
    %v185 = vpop.permute.xlu0 %184
    %186 = vset.pattern.permute.xlu0 0
    %187 = vperm.xlu0 %186, %v144
    %v188 = vpop.permute.xlu0 %187
    %189 = vset.pattern.permute.xlu0 0
    %190 = vperm.xlu0 %189, %v145
    %v191 = vpop.permute.xlu0 %190
    %192 = vset.pattern.permute.xlu0 0
    %193 = vperm.xlu0 %192, %v146
    %v194 = vpop.permute.xlu0 %193
    %vm195 = vcmp.eq.s32.totalorder %v149, %v130
    %vm196 = vcmp.eq.s32.totalorder %v152, %v130
    %vm197 = vcmp.eq.s32.totalorder %v155, %v130
    %vm198 = vcmp.eq.s32.totalorder %v158, %v130
    %vm199 = vcmp.eq.s32.totalorder %v161, %v130
    %vm200 = vcmp.eq.s32.totalorder %v164, %v130
    %vm201 = vcmp.eq.s32.totalorder %v167, %v130
    %vm202 = vcmp.eq.s32.totalorder %v170, %v130
    %vm203 = vcmp.eq.s32.totalorder %v173, %v130
    %vm204 = vcmp.eq.s32.totalorder %v176, %v130
    %vm205 = vcmp.eq.s32.totalorder %v179, %v130
    %vm206 = vcmp.eq.s32.totalorder %v182, %v130
    %vm207 = vcmp.eq.s32.totalorder %v185, %v130
    %vm208 = vcmp.eq.s32.totalorder %v188, %v130
    %vm209 = vcmp.eq.s32.totalorder %v191, %v130
    %vm210 = vcmp.eq.s32.totalorder %v194, %v130
    %v211 = vsel %vm195, 1, 0
    %v212 = vsel %vm196, 1, 0
    %v213 = vsel %vm197, 1, 0
    %v214 = vsel %vm198, 1, 0
    %v215 = vsel %vm199, 1, 0
    %v216 = vsel %vm200, 1, 0
    %v217 = vsel %vm201, 1, 0
    %v218 = vsel %vm202, 1, 0
    %v219 = vsel %vm203, 1, 0
    %v220 = vsel %vm204, 1, 0
    %v221 = vsel %vm205, 1, 0
    %v222 = vsel %vm206, 1, 0
    %v223 = vsel %vm207, 1, 0
    %v224 = vsel %vm208, 1, 0
    %v225 = vsel %vm209, 1, 0
    %v226 = vsel %vm210, 1, 0
    %v227 = vcvt.s32.f32 %v211
    %v228 = vcvt.s32.f32 %v212
    %v229 = vcvt.s32.f32 %v213
    %v230 = vcvt.s32.f32 %v214
    %v231 = vcvt.s32.f32 %v215
    %v232 = vcvt.s32.f32 %v216
    %v233 = vcvt.s32.f32 %v217
    %v234 = vcvt.s32.f32 %v218
    %v235 = vcvt.s32.f32 %v219
    %v236 = vcvt.s32.f32 %v220
    %v237 = vcvt.s32.f32 %v221
    %v238 = vcvt.s32.f32 %v222
    %v239 = vcvt.s32.f32 %v223
    %v240 = vcvt.s32.f32 %v224
    %v241 = vcvt.s32.f32 %v225
    %v242 = vcvt.s32.f32 %v226
    %v243 = vld [vmem:[#allocation2] sm:$0xff]
    %v244 = vld [vmem:[#allocation2 + $0x8] sm:$0xff]
    %v245 = vld [vmem:[#allocation2 + $0x10] sm:$0xff]
    %v246 = vld [vmem:[#allocation2 + $0x18] sm:$0xff]
    %247 = vmatpush.msra.mxu0 %v242
    %248 = vmatpush.msra.mxu0 %v241
    %249 = vmatpush.msra.mxu0 %v240
    %250 = vmatpush.msra.mxu0 %v239
    %251 = vmatpush.msra.mxu0 %v238
    %252 = vmatpush.msra.mxu0 %v237
    %253 = vmatpush.msra.mxu0 %v236
    %254 = vmatpush.msra.mxu0 %v235
    %255 = vmatpush.msra.mxu0 %v234
    %256 = vmatpush.msra.mxu0 %v233
    %257 = vmatpush.msra.mxu0 %v232
    %258 = vmatpush.msra.mxu0 %v231
    %259 = vmatpush.msra.mxu0 %v230
    %260 = vmatpush.msra.mxu0 %v229
    %261 = vmatpush.msra.mxu0 %v228
    %262 = vmatpush.msra.mxu0 %v227
    %263 = vmatmul.f32.gmra.mxu0 %v118
    %v264 = vpop.f32.mrf.mxu0
    %v265 = vadd.f32 0.0, %v264
    %266 = vmatmul.f32.gmra.mxu0 %v119
    %v267 = vpop.f32.mrf.mxu0
    %v268 = vadd.f32 0.0, %v267
    %269 = vmatmul.f32.gmra.mxu0 %v124
    %v270 = vpop.f32.mrf.mxu0
    %v271 = vadd.f32 0.0, %v270
    %272 = vmatmul.f32.gmra.mxu0 %v125
    %v273 = vpop.f32.mrf.mxu0
    %v274 = vadd.f32 0.0, %v273
    %275 = vdwg.mxu0
    %v276 = vadd.f32 %v243, %v265
    %v277 = vadd.f32 %v244, %v268
    %v278 = vadd.f32 %v245, %v271
    %v279 = vadd.f32 %v246, %v274
    %280 = vst [vmem:[#allocation2] sm:$0xff] %v276
    %281 = vst [vmem:[#allocation2 + $0x8] sm:$0xff] %v277
    %282 = vst [vmem:[#allocation2 + $0x10] sm:$0xff] %v278
    %283 = vst [vmem:[#allocation2 + $0x18] sm:$0xff] %v279
    // Predicated region
    $region26: #{tpu_custom_call.1} parent=1 // pred_check
      %p284 = pneg %p21
    $region27: #{tpu_custom_call.1} parent=1 // pred_check_branch
      %286 = sbr.rel (%p284) target = $region29
    $region28: #{tpu_custom_call.1} parent=1 // pred_region
      %v287 = vld [vmem:[#allocation2] sm:$0xff]
      %v288 = vld [vmem:[#allocation2 + $0x8] sm:$0xff]
      %v289 = vld [vmem:[#allocation2 + $0x10] sm:$0xff]
      %v290 = vld [vmem:[#allocation2 + $0x18] sm:$0xff]
      %v291 = vld [vmem:[%s4] sm:$0x1]
      %v293 = vperm.slane %v291, 0
      %v295 = vmul.f32 %v287, %v293
      %v296 = vmul.f32 %v288, %v293
      %v297 = vmul.f32 %v289, %v293
      %v298 = vmul.f32 %v290, %v293
      %vm299 = vcmp.ge.f32.partialorder %v295, 0.0
      %vm300 = vcmp.ge.f32.partialorder %v296, 0.0
      %vm301 = vcmp.ge.f32.partialorder %v297, 0.0
      %vm302 = vcmp.ge.f32.partialorder %v298, 0.0
      %v303 = vmul.f32 %v295, 0.22916667
      %v304 = vmul.f32 %v296, 0.22916667
      %v305 = vmul.f32 %v297, 0.22916667
      %v306 = vmul.f32 %v298, 0.22916667
      %v307 = vsel %vm299, %v295, %v303
      %v308 = vsel %vm300, %v296, %v304
      %v309 = vsel %vm301, %v297, %v305
      %v310 = vsel %vm302, %v298, %v306
      %311 = vst [vmem:[#allocation2] sm:$0xff] %v307
      %312 = vst [vmem:[#allocation2 + $0x8] sm:$0xff] %v308
      %313 = vst [vmem:[#allocation2 + $0x10] sm:$0xff] %v309
      %314 = vst [vmem:[#allocation2 + $0x18] sm:$0xff] %v310
    $region29: #{tpu_custom_call.1} parent=1 // pred_fallthru
      _
    // Predicated region
    $region30: #{tpu_custom_call.1} parent=1 // pred_check
      _
    $region31: #{tpu_custom_call.1} parent=1 // pred_check_branch
      %316 = sbr.rel (0) target = $region33
    $region32: #{tpu_custom_call.1} parent=1 // pred_region
      %318 = vsyncadd [#allocation3], 0
      %s319 = sshll.u32 [#allocation2], 4
      %s320 = int_to_ptr.vmem [resolvable:$true] %s319
      %s321 = sshll.u32 %s5, 4
      %s322 = int_to_ptr.hbm [resolvable:$true] %s321
      %327 = dma.vmem_to_hbm [thread:$0]  %s320, 512, %s322, [#allocation3], 128, 128, 8
    $region33: #{tpu_custom_call.1} parent=1 // pred_fallthru
      _
    // Predicated region
    $region34: #{tpu_custom_call.1} parent=1 // pred_check
      _
    $region35: #{tpu_custom_call.1} parent=1 // pred_check_branch
      %329 = sbr.rel (0) target = $region37
    $region36: #{tpu_custom_call.1} parent=1 // pred_region
      %331 = dma.done [#allocation3], 512
    $region37: #{tpu_custom_call.1} parent=1 // pred_fallthru
      _
    %332 = vsyncpa [#allocation3], 1

</llo_original>
